<compile_context>
chip_gen: v7x
topology: tpu7x:2x2x1
jax: 0.10.0
libtpu: 0.0.40
codegen_flags: <defaults>
</compile_context>

<pallas_src>
import functools
import math

import jax
import jax.numpy as jnp
import numpy as np
from jax.experimental import pallas as pl
from jax.experimental.pallas import tpu as pltpu

_MIB = 1024 * 1024
_K_ALIGN = 16  # sublane alignment valid for both f32 (8) and bf16 (16) weights


def _round_up(v, m):
    return (v + m - 1) // m * m


def _tpu_vmem_capacity_bytes():
    try:
        return int(pltpu.get_tpu_info().vmem_capacity_bytes)
    except Exception:
        return 64 * _MIB  # conservative (v7x-sized) fallback


def _is_dual_tensorcore_chip():
    try:
        return "v7" in jax.local_devices()[0].device_kind.lower()
    except Exception:
        return False


# ----------------------------------------------------------------------------
# One-time init (the PyTorch module builds its random matrices in __init__).
# ----------------------------------------------------------------------------
def prepare_random_layer(random_matrices, weight_dtype=None):
    """Pre-cast (optionally) and concatenate the fixed random matrices.

    weight_dtype=None keeps f32 storage; jnp.bfloat16 halves the dominant
    weight HBM stream. Done once here, NOT per forward call.
    """
    num_inputs = len(random_matrices)
    assert num_inputs >= 1
    output_dim = int(random_matrices[0].shape[1])

    k_sizes, k_offsets, padded = [], [], []
    off = 0
    for w in random_matrices:
        k, n = int(w.shape[0]), int(w.shape[1])
        assert n == output_dim
        kp = _round_up(k, _K_ALIGN)
        wd = w if weight_dtype is None else w.astype(weight_dtype)
        if kp != k:  # zero row-padding: contributes nothing to x @ w
            wd = jnp.concatenate(
                [wd, jnp.zeros((kp - k, output_dim), wd.dtype)], axis=0)
        padded.append(wd)
        k_sizes.append(k)
        k_offsets.append(off)
        off += kp
    w_cat = padded[0] if len(padded) == 1 else jnp.concatenate(padded, axis=0)
    return dict(w_cat=w_cat, k_offsets=tuple(k_offsets),
                k_sizes=tuple(k_sizes), output_dim=output_dim,
                num_inputs=num_inputs)


# ----------------------------------------------------------------------------
# Kernel
# ----------------------------------------------------------------------------
def _random_layer_kernel(k_offsets, k_sizes, inv_scale, *refs):
    """refs = (x_0, ..., x_{N-1}, w_cat_tile, out_ref).

    x_i   : whole [B, K_i] f32 activation (VMEM-resident, grid-invariant)
    w_cat : [sum_Kp, TN] column tile of the concatenated random matrices
    out   : [B, TN] output tile
    """
    out_ref = refs[-1]
    w_ref = refs[-2]

    acc = None
    for i, (k0, ksz) in enumerate(zip(k_offsets, k_sizes)):
        # Static, sublane-aligned slice of the concatenated weight tile.
        w = w_ref[k0:k0 + ksz, :].astype(jnp.float32)
        term = jnp.dot(refs[i][...], w, preferred_element_type=jnp.float32)
        acc = term * inv_scale if acc is None else acc * term
    out_ref[...] = acc.astype(out_ref.dtype)


# ----------------------------------------------------------------------------
# Tiling / VMEM plan
# ----------------------------------------------------------------------------
def _plan_tiling(output_dim, batch, sum_kp, x_isz, w_isz,
                 tile_n=None, force_multi_step=False):
    vmem_cap = _tpu_vmem_capacity_bytes()
    if vmem_cap >= 100 * _MIB:       # v5e / v6e: 128 MiB physical VMEM
        budget = 96 * _MIB
        limit_cap = 112 * _MIB
    else:                            # v7x: 64 MiB physical VMEM
        budget = 44 * _MIB
        limit_cap = 56 * _MIB

    def vmem_bytes(tn):
        resident_x = batch * sum_kp * x_isz            # single copy
        w_tiles = 2 * sum_kp * tn * w_isz              # double-buffered
        out_tile = 2 * batch * tn * 4                  # double-buffered f32
        return resident_x + w_tiles + out_tile

    if tile_n is None:
        candidates = []
        # Single grid step only when we are NOT trying to shard the output
        # columns across two TensorCores, and the tile stays <= 2048 so the
        # product chain does not overflow the vreg file.
        if not force_multi_step and output_dim <= 2048:
            candidates.append(output_dim)
        for t in (2048, 1024, 512, 256, 128):
            if t < output_dim and output_dim % t == 0:
                candidates.append(t)
        if not candidates:
            candidates.append(output_dim)
        tile_n = None
        for t in candidates:
            if vmem_bytes(t) <= budget:
                tile_n = t
                break
        if tile_n is None:
            tile_n = candidates[-1]

    assert output_dim % tile_n == 0, "output_dim must be a multiple of tile_n"
    need = vmem_bytes(tile_n)
    vmem_limit = int(min(limit_cap, max(32 * _MIB, need + 8 * _MIB)))
    return tile_n, vmem_limit


# ----------------------------------------------------------------------------
# Forward wrapper
# ----------------------------------------------------------------------------
def random_layer_forward(params, input_list, tile_n=None):
    num_inputs = params["num_inputs"]
    output_dim = params["output_dim"]
    k_sizes = params["k_sizes"]
    k_offsets = params["k_offsets"]
    w_cat = params["w_cat"]

    assert len(input_list) == num_inputs
    B = int(input_list[0].shape[0])
    for x, k in zip(input_list, k_sizes):
        assert x.shape == (B, k)
    # Activations stay f32 (tiny HBM contribution; avoids sublane padding).
    input_list = [x.astype(jnp.float32) for x in input_list]

    sum_kp = int(w_cat.shape[0])
    x_isz = 4
    w_isz = jnp.dtype(w_cat.dtype).itemsize

    tile_n, vmem_limit = _plan_tiling(
        output_dim, B, sum_kp, x_isz, w_isz, tile_n=tile_n,
        force_multi_step=_is_dual_tensorcore_chip())
    grid = (output_dim // tile_n,)

    inv_scale = 1.0 / math.pow(float(output_dim), 1.0 / num_inputs)

    # Tiny grid-invariant activations: whole-array VMEM-resident, no per-step
    # DMA. Only the concatenated weight tile streams through the pipeline.
    in_specs = [pl.BlockSpec(memory_space=pltpu.MemorySpace.VMEM)
                for _ in range(num_inputs)]
    in_specs.append(pl.BlockSpec((sum_kp, tile_n), lambda j: (0, j)))
    out_spec = pl.BlockSpec((B, tile_n), lambda j: (0, j))

    flops = (sum(2 * B * k * output_dim for k in k_sizes)
             + num_inputs * B * output_dim)           # (N-1) muls + 1 scale
    bytes_accessed = (sum(B * k * x_isz for k in k_sizes)
                      + sum_kp * output_dim * w_isz
                      + B * output_dim * 4)
    cost = pl.CostEstimate(flops=flops, transcendentals=0,
                           bytes_accessed=bytes_accessed)

    kernel = functools.partial(_random_layer_kernel, k_offsets, k_sizes,
                               inv_scale)

    return pl.pallas_call(
        kernel,
        out_shape=jax.ShapeDtypeStruct((B, output_dim), jnp.float32),
        grid_spec=pl.GridSpec(grid=grid, in_specs=in_specs,
                              out_specs=out_spec),
        compiler_params=pltpu.CompilerParams(
            dimension_semantics=("parallel",),
            vmem_limit_bytes=vmem_limit),
        cost_estimate=cost,
    )(*input_list, w_cat)


# ----------------------------------------------------------------------------
# Pure reference (float64 on host) matching the PyTorch forward exactly.
# ----------------------------------------------------------------------------
def random_layer_reference(input_list, random_matrices, output_dim):
    outs = [np.asarray(x, np.float64) @ np.asarray(w, np.float64)
            for x, w in zip(input_list, random_matrices)]
    result = outs[0] / math.pow(float(output_dim), 1.0 / len(outs))
    for o in outs[1:]:
        result = result * o
    return result


def _rel_err(a, b):
    a = np.asarray(a, np.float64)
    b = np.asarray(b, np.float64)
    return float(np.linalg.norm(a - b) / (np.linalg.norm(b) + 1e-30))


if __name__ == "__main__":
    key = jax.random.PRNGKey(0)
    B = 8
    input_dim_list = [32, 48]
    n = len(input_dim_list)

    def make_case(output_dim, k):
        ks = jax.random.split(k, 2 * n)
        rms = [jax.random.normal(ks[i], (input_dim_list[i], output_dim),
                                 jnp.float32) for i in range(n)]
        xs = [jax.random.normal(ks[n + i], (B, input_dim_list[i]),
                                jnp.float32) for i in range(n)]
        return xs, rms

    # Case 1: module-default output_dim=256, f32 weight storage.
    xs, rms = make_case(256, key)
    params = prepare_random_layer(rms)                       # one-time init
    out = jax.block_until_ready(random_layer_forward(params, xs))
    ref = random_layer_reference(xs, rms, 256)
    assert out.shape == (B, 256)
    assert _rel_err(out, ref) < 1e-2, "f32 path mismatch"

    # Case 2: bf16 weight storage, pre-cast ONCE at init (activations f32).
    params_bf16 = prepare_random_layer(rms, weight_dtype=jnp.bfloat16)
    out_bf = jax.block_until_ready(random_layer_forward(params_bf16, xs))
    assert _rel_err(out_bf, ref) < 3e-2, "bf16-weight path error too large"

    # Case 3: multi-step tiled path (forced tile_n=512 -> 2 lane-dense steps).
    xs2, rms2 = make_case(1024, jax.random.PRNGKey(1))
    params2 = prepare_random_layer(rms2)
    out2 = jax.block_until_ready(random_layer_forward(params2, xs2, tile_n=512))
    ref2 = random_layer_reference(xs2, rms2, 1024)
    assert out2.shape == (B, 1024)
    assert _rel_err(out2, ref2) < 1e-2, "tiled path mismatch"

    print("KERNEL_OK")
</pallas_src>

<mosaic_0001>
module attributes {stable_mosaic.version = 11 : i64} {
  func.func @_random_layer_kernel(%arg0: i32, %arg1: memref<8x32xf32, #tpu.memory_space<vmem>>, %arg2: memref<8x48xf32, #tpu.memory_space<vmem>>, %arg3: memref<80x256xf32, #tpu.memory_space<vmem>>, %arg4: memref<8x256xf32, #tpu.memory_space<vmem>>) attributes {dimension_semantics = [#tpu.dimension_semantics<parallel>], iteration_bounds = array<i64: 1>, scalar_prefetch = 0 : i64, scratch_operands = 0 : i64, tpu.core_type = #tpu.core_type<tc>, window_params = [{pipeline_mode = #tpu.pipeline_mode<synchronous>, transform_indices = @transform_0, window_bounds = array<i64: 8, 32>}, {pipeline_mode = #tpu.pipeline_mode<synchronous>, transform_indices = @transform_1, window_bounds = array<i64: 8, 48>}, {transform_indices = @transform_2, window_bounds = array<i64: 80, 256>}, {transform_indices = @transform_3, window_bounds = array<i64: 8, 256>}]} {
    %c0 = arith.constant 0 : index
    %c0_0 = arith.constant 0 : index
    %0 = vector.load %arg3[%c0, %c0_0] : memref<80x256xf32, #tpu.memory_space<vmem>>, vector<32x256xf32>
    %c0_1 = arith.constant 0 : index
    %c0_2 = arith.constant 0 : index
    %1 = vector.load %arg1[%c0_1, %c0_2] : memref<8x32xf32, #tpu.memory_space<vmem>>, vector<8x32xf32>
    %cst = arith.constant dense<0.000000e+00> : vector<8x256xf32>
    %2 = tpu.matmul %1, %0, %cst {dimension_numbers = #tpu.dot_dimension_numbers<[1], [0], [0], [1], [0, 0, 1, 1], [], []>} : vector<8x32xf32>, vector<32x256xf32>, vector<8x256xf32> -> vector<8x256xf32>
    %cst_3 = arith.constant 6.250000e-02 : f32
    %3 = vector.broadcast %cst_3 : f32 to vector<8x256xf32>
    %4 = arith.mulf %2, %3 : vector<8x256xf32>
    %c32 = arith.constant 32 : index
    %c0_4 = arith.constant 0 : index
    %5 = vector.load %arg3[%c32, %c0_4] : memref<80x256xf32, #tpu.memory_space<vmem>>, vector<48x256xf32>
    %c0_5 = arith.constant 0 : index
    %c0_6 = arith.constant 0 : index
    %6 = vector.load %arg2[%c0_5, %c0_6] : memref<8x48xf32, #tpu.memory_space<vmem>>, vector<8x48xf32>
    %cst_7 = arith.constant dense<0.000000e+00> : vector<8x256xf32>
    %7 = tpu.matmul %6, %5, %cst_7 {dimension_numbers = #tpu.dot_dimension_numbers<[1], [0], [0], [1], [0, 0, 1, 1], [], []>} : vector<8x48xf32>, vector<48x256xf32>, vector<8x256xf32> -> vector<8x256xf32>
    %8 = arith.mulf %4, %7 : vector<8x256xf32>
    %c0_8 = arith.constant 0 : index
    %c0_9 = arith.constant 0 : index
    %9 = vector.load %arg4[%c0_8, %c0_9] : memref<8x256xf32, #tpu.memory_space<vmem>>, vector<8x256xf32>
    tpu.vector_store %arg4[%c0_8, %c0_9], %8 {strides = array<i32>} : memref<8x256xf32, #tpu.memory_space<vmem>>, vector<8x256xf32>,
    return
  }
  func.func @transform_0(%arg0: i32) -> (i32, i32) {
    %c0_i32 = arith.constant 0 : i32
    %c0_i32_0 = arith.constant 0 : i32
    %c0_i32_1 = arith.constant 0 : i32
    return %c0_i32, %c0_i32_0 : i32, i32
  }
  func.func @transform_1(%arg0: i32) -> (i32, i32) {
    %c0_i32 = arith.constant 0 : i32
    %c0_i32_0 = arith.constant 0 : i32
    %c0_i32_1 = arith.constant 0 : i32
    return %c0_i32, %c0_i32_0 : i32, i32
  }
  func.func @transform_2(%arg0: i32) -> (i32, i32) {
    %c0_i32 = arith.constant 0 : i32
    %c0_i32_0 = arith.constant 0 : i32
    return %c0_i32, %arg0 : i32, i32
  }
  func.func @transform_3(%arg0: i32) -> (i32, i32) {
    %c0_i32 = arith.constant 0 : i32
    %c0_i32_0 = arith.constant 0 : i32
    return %c0_i32, %arg0 : i32, i32
  }
}

</mosaic_0001>

<llo_original>
// kernel: tpu_custom_call.1
$region0: #{tpu_custom_call.1}
  #allocation0 [shape = 'u32[]', space=smem, size = 0x4, offset = 0x4, fixed_abs, tag = 'smem constant byte address 0x4 - core index']
  #allocation1 [shape = 'u32[144,128]{1,0:T(1,128)}', space=vmem, size = 0x12000, scoped, tag = 'internal scratch']
  %s0 = inlined_call_operand.hbm [shape: f32[8,32], index: 0, kind: input, shape index: {}]
  %s1 = inlined_call_operand.hbm [shape: f32[8,48], index: 1, kind: input, shape index: {}]
  %s2 = inlined_call_operand.hbm [shape: f32[80,256], index: 2, kind: input, shape index: {}]
  %s3 = inlined_call_operand.hbm [shape: f32[8,256], index: 3, kind: output, shape index: {}]
  %s4 = sld [smem:[#allocation0]]
  $region34: #{tpu_custom_call.1} parent=0
    _
  %s6 = ssub.s32 1, %s4
  %s7 = scalar_select 0, %s6, %s4
  $region1: #{tpu_custom_call.1} parent=0
    #allocation2 [shape = 'u8[4096]{0}', space=vmem, size = 0x1000, scoped, tag = 'input window, operand 0, single buffered']
    #allocation3 [shape = 's32[1]{0}', space=sflag, size = 0x4, scoped, tag = 'scoped memory for tpu_custom_call.1']
    #allocation4 [shape = 's32[1]{0}', space=sflag, size = 0x4, scoped, tag = 'scoped memory for tpu_custom_call.1']
    #allocation5 [shape = 'u8[4096]{0}', space=vmem, size = 0x1000, scoped, tag = 'input window, operand 1, single buffered']
    #allocation6 [shape = 's32[1]{0}', space=sflag, size = 0x4, scoped, tag = 'scoped memory for tpu_custom_call.1']
    #allocation7 [shape = 'u8[81920]{0}', space=vmem, size = 0x14000, scoped, tag = 'input window, operand 2, single buffered']
    #allocation8 [shape = 'u8[8192]{0}', space=vmem, size = 0x2000, scoped, tag = 'output window, operand 0, single buffered']
    %8 = vsyncpa [#allocation3], 0
    %9 = vsyncpa [#allocation6], 0
    %10 = vsyncpa [#allocation4], 0
    // Predicated region
    $region2: #{tpu_custom_call.1} parent=1 // pred_check
      _
    $region3: #{tpu_custom_call.1} parent=1 // pred_check_branch
      %12 = sbr.rel (0) target = $region5
    $region4: #{tpu_custom_call.1} parent=1 // pred_region
      %s14 = ssub.s32 128, 128
      %15 = vsyncadd [#allocation3], %s14
      %s17 = sshll.u32 [#allocation2], 4
      %s18 = int_to_ptr.vmem [resolvable:$true] %s17
      %20 = dma.hbm_to_vmem [thread:$0]  %s0, 128, %s18, [#allocation3]
    $region5: #{tpu_custom_call.1} parent=1 // pred_fallthru
      _
    // Predicated region
    $region6: #{tpu_custom_call.1} parent=1 // pred_check
      _
    $region7: #{tpu_custom_call.1} parent=1 // pred_check_branch
      %22 = sbr.rel (0) target = $region9
    $region8: #{tpu_custom_call.1} parent=1 // pred_region
      %s24 = ssub.s32 128, 128
      %25 = vsyncadd [#allocation6], %s24
      %s27 = sshll.u32 [#allocation5], 4
      %s28 = int_to_ptr.vmem [resolvable:$true] %s27
      %30 = dma.hbm_to_vmem [thread:$0]  %s1, 128, %s28, [#allocation6]
    $region9: #{tpu_custom_call.1} parent=1 // pred_fallthru
      _
    // Predicated region
    $region10: #{tpu_custom_call.1} parent=1 // pred_check
      _
    $region11: #{tpu_custom_call.1} parent=1 // pred_check_branch
      %32 = sbr.rel (0) target = $region13
    $region12: #{tpu_custom_call.1} parent=1 // pred_region
      %s34 = ssub.s32 2560, 2560
      %35 = vsyncadd [#allocation6], %s34
      %s36 = sshll.u32 [#allocation7], 4
      %s37 = int_to_ptr.vmem [resolvable:$true] %s36
      %42 = dma.hbm_to_vmem [thread:$0]  %s2, 2560, %s37, [#allocation6], 256, 256, 16
    $region13: #{tpu_custom_call.1} parent=1 // pred_fallthru
      _
    // Predicated region
    $region14: #{tpu_custom_call.1} parent=1 // pred_check
      _
    $region15: #{tpu_custom_call.1} parent=1 // pred_check_branch
      %44 = sbr.rel (0) target = $region17
    $region16: #{tpu_custom_call.1} parent=1 // pred_region
      %45 = dma.done [#allocation3], 128
    $region17: #{tpu_custom_call.1} parent=1 // pred_fallthru
      _
    // Predicated region
    $region18: #{tpu_custom_call.1} parent=1 // pred_check
      _
    $region19: #{tpu_custom_call.1} parent=1 // pred_check_branch
      %47 = sbr.rel (0) target = $region21
    $region20: #{tpu_custom_call.1} parent=1 // pred_region
      %48 = dma.done [#allocation6], 128
    $region21: #{tpu_custom_call.1} parent=1 // pred_fallthru
      _
    // Predicated region
    $region22: #{tpu_custom_call.1} parent=1 // pred_check
      _
    $region23: #{tpu_custom_call.1} parent=1 // pred_check_branch
      %50 = sbr.rel (0) target = $region25
    $region24: #{tpu_custom_call.1} parent=1 // pred_region
      %51 = dma.done [#allocation6], 2560
    $region25: #{tpu_custom_call.1} parent=1 // pred_fallthru
      _
    %v52 = vld [vmem:[#allocation7] sm:$0xff]
    %v53 = vld [vmem:[#allocation7 + $0x8] sm:$0xff]
    %v54 = vld [vmem:[#allocation7 + $0x10] sm:$0xff]
    %v55 = vld [vmem:[#allocation7 + $0x18] sm:$0xff]
    %v56 = vld [vmem:[#allocation7 + $0x20] sm:$0xff]
    %v57 = vld [vmem:[#allocation7 + $0x28] sm:$0xff]
    %v58 = vld [vmem:[#allocation7 + $0x30] sm:$0xff]
    %v59 = vld [vmem:[#allocation7 + $0x38] sm:$0xff]
    %v60 = vld [vmem:[#allocation2] sm:$0xff]
    %vm61 = vcmask 261120
    %v63 = vsel %vm61, %v60, 0
    %65 = vmatprep.subr.mxu0 %v53
    %66 = vmatpush1.msra.mxu0 %v52
    %67 = vmatprep.subr.mxu0 %v55
    %68 = vmatpush1.msra.mxu0 %v54
    %69 = vmatprep.subr.mxu0 %v57
    %70 = vmatpush1.msra.mxu0 %v56
    %71 = vmatprep.subr.mxu0 %v59
    %72 = vmatpush1.msra.mxu0 %v58
    %73 = vmatprep.subr.mxu0 0.0
    %74 = vmatpush1.msra.mxu0 0.0
    %75 = vmatprep.subr.mxu0 0.0
    %76 = vmatpush1.msra.mxu0 0.0
    %77 = vmatprep.subr.mxu0 0.0
    %78 = vmatpush1.msra.mxu0 0.0
    %79 = vmatprep.subr.mxu0 0.0
    %80 = vmatpush1.msra.mxu0 0.0
    %81 = vmatprep.subr.mxu0 0.0
    %82 = vmatpush1.msra.mxu0 0.0
    %83 = vmatprep.subr.mxu0 0.0
    %84 = vmatpush1.msra.mxu0 0.0
    %85 = vmatprep.subr.mxu0 0.0
    %86 = vmatpush1.msra.mxu0 0.0
    %87 = vmatprep.subr.mxu0 0.0
    %88 = vmatpush1.msra.mxu0 0.0
    %89 = vmatprep.subr.mxu0 0.0
    %90 = vmatpush1.msra.mxu0 0.0
    %91 = vmatprep.subr.mxu0 0.0
    %92 = vmatpush1.msra.mxu0 0.0
    %93 = vmatprep.subr.mxu0 0.0
    %94 = vmatpush1.msra.mxu0 0.0
    %95 = vmatprep.subr.mxu0 0.0
    %96 = vmatpush1.msra.mxu0 0.0
    %97 = vmatprep.subr.mxu0 0.0
    %98 = vmatpush1.msra.mxu0 0.0
    %99 = vmatprep.subr.mxu0 0.0
    %100 = vmatpush1.msra.mxu0 0.0
    %101 = vmatprep.subr.mxu0 0.0
    %102 = vmatpush1.msra.mxu0 0.0
    %103 = vmatprep.subr.mxu0 0.0
    %104 = vmatpush1.msra.mxu0 0.0
    %105 = vmatprep.subr.mxu0 0.0
    %106 = vmatpush1.msra.mxu0 0.0
    %107 = vmatprep.subr.mxu0 0.0
    %108 = vmatpush1.msra.mxu0 0.0
    %109 = vmatprep.subr.mxu0 0.0
    %110 = vmatpush1.msra.mxu0 0.0
    %111 = vmatprep.subr.mxu0 0.0
    %112 = vmatpush1.msra.mxu0 0.0
    %113 = vmatprep.subr.mxu0 0.0
    %114 = vmatpush1.msra.mxu0 0.0
    %115 = vmatprep.subr.mxu0 0.0
    %116 = vmatpush1.msra.mxu0 0.0
    %117 = vmatprep.subr.mxu0 0.0
    %118 = vmatpush1.msra.mxu0 0.0
    %119 = vmatprep.subr.mxu0 0.0
    %120 = vmatpush1.msra.mxu0 0.0
    %121 = vmatprep.subr.mxu0 0.0
    %122 = vmatpush1.msra.mxu0 0.0
    %123 = vmatprep.subr.mxu0 0.0
    %124 = vmatpush1.msra.mxu0 0.0
    %125 = vmatprep.subr.mxu0 0.0
    %126 = vmatpush1.msra.mxu0 0.0
    %127 = vmatprep.subr.mxu0 0.0
    %128 = vmatpush1.msra.mxu0 0.0
    %129 = vmatprep.mubr.f32.mxu0 0.0
    %130 = vmatmul.mubr.f32.gmra.mrb[0].mxu0 %v63
    %v131 = vpop.f32.mrb[0].mxu0
    %v132 = vadd.f32 0.0, %v131
    %v133 = vpop.f32.mrb[0].mxu0
    %v134 = vadd.f32 0.0, %v133
    %135 = vdwg.mxu0
    %v136 = vmul.f32 %v132, 0.0625
    %v137 = vmul.f32 %v134, 0.0625
    %v138 = vld [vmem:[#allocation7 + $0x40] sm:$0xff]
    %v139 = vld [vmem:[#allocation7 + $0x48] sm:$0xff]
    %v140 = vld [vmem:[#allocation7 + $0x50] sm:$0xff]
    %v141 = vld [vmem:[#allocation7 + $0x58] sm:$0xff]
    %v142 = vld [vmem:[#allocation7 + $0x60] sm:$0xff]
    %v143 = vld [vmem:[#allocation7 + $0x68] sm:$0xff]
    %v144 = vld [vmem:[#allocation7 + $0x70] sm:$0xff]
    %v145 = vld [vmem:[#allocation7 + $0x78] sm:$0xff]
    %v146 = vld [vmem:[#allocation7 + $0x80] sm:$0xff]
    %v147 = vld [vmem:[#allocation7 + $0x88] sm:$0xff]
    %v148 = vld [vmem:[#allocation7 + $0x90] sm:$0xff]
    %v149 = vld [vmem:[#allocation7 + $0x98] sm:$0xff]
    %v150 = vld [vmem:[#allocation5] sm:$0xff]
    %vm151 = vcmask 392192
    %v153 = vsel %vm151, %v150, 0
    %155 = vmatprep.subr.mxu0 %v139
    %156 = vmatpush1.msra.mxu0 %v138
    %157 = vmatprep.subr.mxu0 %v141
    %158 = vmatpush1.msra.mxu0 %v140
    %159 = vmatprep.subr.mxu0 %v143
    %160 = vmatpush1.msra.mxu0 %v142
    %161 = vmatprep.subr.mxu0 %v145
    %162 = vmatpush1.msra.mxu0 %v144
    %163 = vmatprep.subr.mxu0 %v147
    %164 = vmatpush1.msra.mxu0 %v146
    %165 = vmatprep.subr.mxu0 %v149
    %166 = vmatpush1.msra.mxu0 %v148
    %167 = vmatprep.subr.mxu0 0.0
    %168 = vmatpush1.msra.mxu0 0.0
    %169 = vmatprep.subr.mxu0 0.0
    %170 = vmatpush1.msra.mxu0 0.0
    %171 = vmatprep.subr.mxu0 0.0
    %172 = vmatpush1.msra.mxu0 0.0
    %173 = vmatprep.subr.mxu0 0.0
    %174 = vmatpush1.msra.mxu0 0.0
    %175 = vmatprep.subr.mxu0 0.0
    %176 = vmatpush1.msra.mxu0 0.0
    %177 = vmatprep.subr.mxu0 0.0
    %178 = vmatpush1.msra.mxu0 0.0
    %179 = vmatprep.subr.mxu0 0.0
    %180 = vmatpush1.msra.mxu0 0.0
    %181 = vmatprep.subr.mxu0 0.0
    %182 = vmatpush1.msra.mxu0 0.0
    %183 = vmatprep.subr.mxu0 0.0
    %184 = vmatpush1.msra.mxu0 0.0
    %185 = vmatprep.subr.mxu0 0.0
    %186 = vmatpush1.msra.mxu0 0.0
    %187 = vmatprep.subr.mxu0 0.0
    %188 = vmatpush1.msra.mxu0 0.0
    %189 = vmatprep.subr.mxu0 0.0
    %190 = vmatpush1.msra.mxu0 0.0
    %191 = vmatprep.subr.mxu0 0.0
    %192 = vmatpush1.msra.mxu0 0.0
    %193 = vmatprep.subr.mxu0 0.0
    %194 = vmatpush1.msra.mxu0 0.0
    %195 = vmatprep.subr.mxu0 0.0
    %196 = vmatpush1.msra.mxu0 0.0
    %197 = vmatprep.subr.mxu0 0.0
    %198 = vmatpush1.msra.mxu0 0.0
    %199 = vmatprep.subr.mxu0 0.0
    %200 = vmatpush1.msra.mxu0 0.0
    %201 = vmatprep.subr.mxu0 0.0
    %202 = vmatpush1.msra.mxu0 0.0
    %203 = vmatprep.subr.mxu0 0.0
    %204 = vmatpush1.msra.mxu0 0.0
    %205 = vmatprep.subr.mxu0 0.0
    %206 = vmatpush1.msra.mxu0 0.0
    %207 = vmatprep.subr.mxu0 0.0
    %208 = vmatpush1.msra.mxu0 0.0
    %209 = vmatprep.subr.mxu0 0.0
    %210 = vmatpush1.msra.mxu0 0.0
    %211 = vmatprep.subr.mxu0 0.0
    %212 = vmatpush1.msra.mxu0 0.0
    %213 = vmatprep.subr.mxu0 0.0
    %214 = vmatpush1.msra.mxu0 0.0
    %215 = vmatprep.subr.mxu0 0.0
    %216 = vmatpush1.msra.mxu0 0.0
    %217 = vmatprep.subr.mxu0 0.0
    %218 = vmatpush1.msra.mxu0 0.0
    %219 = vmatprep.mubr.f32.mxu0 0.0
    %220 = vmatmul.mubr.f32.gmra.mrb[0].mxu0 %v153
    %v221 = vpop.f32.mrb[0].mxu0
    %v222 = vadd.f32 0.0, %v221
    %v223 = vpop.f32.mrb[0].mxu0
    %v224 = vadd.f32 0.0, %v223
    %225 = vdwg.mxu0
    %v226 = vmul.f32 %v136, %v222
    %v227 = vmul.f32 %v137, %v224
    %228 = vst [vmem:[#allocation8] sm:$0xff] %v226
    %229 = vst [vmem:[#allocation8 + $0x8] sm:$0xff] %v227
    // Predicated region
    $region26: #{tpu_custom_call.1} parent=1 // pred_check
      _
    $region27: #{tpu_custom_call.1} parent=1 // pred_check_branch
      %231 = sbr.rel (0) target = $region29
    $region28: #{tpu_custom_call.1} parent=1 // pred_region
      %s233 = ssub.s32 256, 256
      %234 = vsyncadd [#allocation4], %s233
      %s236 = sshll.u32 [#allocation8], 4
      %s237 = int_to_ptr.vmem [resolvable:$true] %s236
      %239 = dma.vmem_to_hbm [thread:$0]  %s237, 256, %s3, [#allocation4]
    $region29: #{tpu_custom_call.1} parent=1 // pred_fallthru
      _
    // Predicated region
    $region30: #{tpu_custom_call.1} parent=1 // pred_check
      _
    $region31: #{tpu_custom_call.1} parent=1 // pred_check_branch
      %241 = sbr.rel (0) target = $region33
    $region32: #{tpu_custom_call.1} parent=1 // pred_region
      %242 = dma.done [#allocation4], 256
    $region33: #{tpu_custom_call.1} parent=1 // pred_fallthru
      _
    %243 = vsyncpa [#allocation3], 1
    %244 = vsyncpa [#allocation6], 1
    %245 = vsyncpa [#allocation4], 1

</llo_original>
